<compile_context>
chip_gen: v6e
topology: v6e:2x2x1
jax: 0.10.0
libtpu: 0.0.40
codegen_flags: <defaults>
</compile_context>

<pallas_src>
import jax
import jax.numpy as jnp
from jax.experimental import pallas as pl
from jax.experimental.pallas import tpu as pltpu

LANE_W = 1024              # lane-dense slab width (multiple of 128)
TILE_R = 1024              # rows per grid step: 1024*1024*4B = 4 MiB per buffer
_PALLAS_MIN_ELEMS = 8192   # below this, XLA's fused elementwise op is faster


def _round_up(a, b):
    return ((a + b - 1) // b) * b


def _linear_kernel(w_ref, b_ref, x_ref, o_ref):
    # y = x * w + b : scalar FMA on the VPU over a lane-dense (TILE_R, 1024)
    # tile.  Scalar params come from SMEM.
    w = w_ref[0, 0]
    b = b_ref[0]
    o_ref[...] = x_ref[...] * w + b


def _affine_pallas(x_flat, weight, bias):
    """Lane-dense, row-tiled Pallas path.  x_flat is 1-D float32 of length n."""
    n = x_flat.shape[0]
    m = pl.cdiv(n, LANE_W)                       # rows of the slab
    tile_r = min(TILE_R, _round_up(m, 8))        # keep sublane dim /8-aligned
    m_pad = _round_up(m, tile_r)                 # pad rows to a whole tile
    total = m_pad * LANE_W

    x_pad = jnp.pad(x_flat, (0, total - n))
    slab = x_pad.reshape(m_pad, LANE_W)

    out = pl.pallas_call(
        _linear_kernel,
        out_shape=jax.ShapeDtypeStruct((m_pad, LANE_W), x_flat.dtype),
        grid=(m_pad // tile_r,),
        in_specs=[
            # scalar parameters live in SMEM, untiled
            pl.BlockSpec(memory_space=pltpu.MemorySpace.SMEM),
            pl.BlockSpec(memory_space=pltpu.MemorySpace.SMEM),
            # lane-dense, row-tiled input (auto double-buffered by Pallas)
            pl.BlockSpec((tile_r, LANE_W), lambda i: (i, 0)),
        ],
        out_specs=pl.BlockSpec((tile_r, LANE_W), lambda i: (i, 0)),
        compiler_params=pltpu.CompilerParams(
            dimension_semantics=("parallel",)),   # megacore sharding on v7x
    )(weight, bias, slab)

    return out.reshape(-1)[:n]


def net_forward(x, weight, bias, *, min_pallas_elems=_PALLAS_MIN_ELEMS):
    """Pallas equivalent of Net.forward: Linear(1, 1)."""
    n, f = x.shape
    assert f == 1 and weight.shape == (1, 1) and bias.shape == (1,)
    if n < min_pallas_elems:
        # Tiny batch: kernel launch overhead dominates, use the fused XLA op.
        return x * weight[0, 0] + bias[0]
    return _affine_pallas(x.reshape(-1), weight, bias).reshape(n, 1)


if __name__ == "__main__":
    key = jax.random.PRNGKey(0)
    kx, kw, kb = jax.random.split(key, 3)

    # Same shape convention as the reference script: x is (100, 1) float32.
    x = jax.random.normal(kx, (100, 1), dtype=jnp.float32)

    # nn.Linear(1, 1) init: U(-1/sqrt(in_features), 1/sqrt(in_features)) = U(-1, 1).
    weight = jax.random.uniform(kw, (1, 1), dtype=jnp.float32, minval=-1.0, maxval=1.0)
    bias = jax.random.uniform(kb, (1,), dtype=jnp.float32, minval=-1.0, maxval=1.0)

    # Force the Pallas path even at this small demo size so the kernel runs.
    out = net_forward(x, weight, bias, min_pallas_elems=0)
    out = jax.block_until_ready(out)

    # Pure-JAX reference of the same affine transform.
    ref = x @ weight.T + bias
    assert out.shape == (100, 1)
    assert jnp.allclose(out, ref, atol=1e-6, rtol=1e-6)

    # Default wrapper (small-N fallback) must agree too.
    out_fb = jax.block_until_ready(net_forward(x, weight, bias))
    assert jnp.allclose(out_fb, ref, atol=1e-6, rtol=1e-6)

    print("KERNEL_OK")
</pallas_src>

<mosaic_0001>
module attributes {stable_mosaic.version = 11 : i64} {
  func.func @_linear_kernel(%arg0: i32, %arg1: memref<1x1xf32, #tpu.memory_space<smem>>, %arg2: memref<1xf32, #tpu.memory_space<smem>>, %arg3: memref<8x1024xf32, #tpu.memory_space<vmem>>, %arg4: memref<8x1024xf32, #tpu.memory_space<vmem>>) attributes {dimension_semantics = [#tpu.dimension_semantics<parallel>], iteration_bounds = array<i64: 1>, scalar_prefetch = 0 : i64, scratch_operands = 0 : i64, tpu.core_type = #tpu.core_type<tc>, window_params = [{transform_indices = @transform_0, window_bounds = array<i64: 1, 1>}, {transform_indices = @transform_1, window_bounds = array<i64: 1>}, {transform_indices = @transform_2, window_bounds = array<i64: 8, 1024>}, {transform_indices = @transform_3, window_bounds = array<i64: 8, 1024>}]} {
    %c0 = arith.constant 0 : index
    %c0_0 = arith.constant 0 : index
    %0 = memref.load %arg1[%c0, %c0_0] : memref<1x1xf32, #tpu.memory_space<smem>>
    %c0_1 = arith.constant 0 : index
    %1 = memref.load %arg2[%c0_1] : memref<1xf32, #tpu.memory_space<smem>>
    %c0_2 = arith.constant 0 : index
    %c0_3 = arith.constant 0 : index
    %2 = vector.load %arg3[%c0_2, %c0_3] : memref<8x1024xf32, #tpu.memory_space<vmem>>, vector<8x1024xf32>
    %3 = vector.broadcast %0 : f32 to vector<8x1024xf32>
    %4 = arith.mulf %2, %3 : vector<8x1024xf32>
    %5 = vector.broadcast %1 : f32 to vector<8x1024xf32>
    %6 = arith.addf %4, %5 : vector<8x1024xf32>
    %c0_4 = arith.constant 0 : index
    %c0_5 = arith.constant 0 : index
    %7 = vector.load %arg4[%c0_4, %c0_5] : memref<8x1024xf32, #tpu.memory_space<vmem>>, vector<8x1024xf32>
    tpu.vector_store %arg4[%c0_4, %c0_5], %6 {strides = array<i32>} : memref<8x1024xf32, #tpu.memory_space<vmem>>, vector<8x1024xf32>,
    return
  }
  func.func @transform_0(%arg0: i32) -> (i32, i32) {
    %c0_i32 = arith.constant 0 : i32
    %c0_i32_0 = arith.constant 0 : i32
    %c0_i32_1 = arith.constant 0 : i32
    return %c0_i32, %c0_i32_0 : i32, i32
  }
  func.func @transform_1(%arg0: i32) -> i32 {
    %c0_i32 = arith.constant 0 : i32
    %c0_i32_0 = arith.constant 0 : i32
    return %c0_i32 : i32
  }
  func.func @transform_2(%arg0: i32) -> (i32, i32) {
    %c0_i32 = arith.constant 0 : i32
    %c0_i32_0 = arith.constant 0 : i32
    return %arg0, %c0_i32 : i32, i32
  }
  func.func @transform_3(%arg0: i32) -> (i32, i32) {
    %c0_i32 = arith.constant 0 : i32
    %c0_i32_0 = arith.constant 0 : i32
    return %arg0, %c0_i32 : i32, i32
  }
}

</mosaic_0001>

<llo_original>
// kernel: tpu_custom_call.1
$region0: #{tpu_custom_call.1}
  #allocation0 [shape = 'u32[]', space=smem, size = 0x4, offset = 0x4, fixed_abs, tag = 'smem constant byte address 0x4 - core index']
  #allocation1 [shape = 'u32[144,128]{1,0:T(1,128)}', space=vmem, size = 0x12000, scoped, tag = 'internal scratch']
  #allocation2 [shape = 'f32[1,1]{1,0:T(1,128)S(6)}', space=smem, size = 0x200, scoped, tag = 'scoped memory for tpu_custom_call.1']
  #allocation3 [shape = 'f32[1]{0:T(128)S(6)}', space=smem, size = 0x200, scoped, tag = 'scoped memory for tpu_custom_call.1']
  %s0 = inlined_call_operand.<no memory space> [shape: f32[1,1], index: 0, kind: input, shape index: {}]
  %s1 = inlined_call_operand.<no memory space> [shape: f32[1], index: 1, kind: input, shape index: {}]
  %s2 = inlined_call_operand.hbm [shape: f32[8,1024], index: 2, kind: input, shape index: {}]
  %s3 = inlined_call_operand.hbm [shape: f32[8,1024], index: 3, kind: output, shape index: {}]
  %s4 = sld [smem:[#allocation0]]
  $region26: #{tpu_custom_call.1} parent=0
    _
  %s6 = ssub.s32 1, %s4
  %s7 = scalar_select 0, %s6, %s4
  %8 = sst [smem:[#allocation2]] %s0
  %9 = sst [smem:[#allocation3]] %s1
  $region1: #{tpu_custom_call.1} parent=0
    #allocation4 [shape = 'u8[32768]{0}', space=vmem, size = 0x8000, scoped, tag = 'input window, operand 2, single buffered']
    #allocation5 [shape = 's32[1]{0}', space=sflag, size = 0x4, scoped, tag = 'scoped memory for tpu_custom_call.1']
    #allocation6 [shape = 's32[1]{0}', space=sflag, size = 0x4, scoped, tag = 'scoped memory for tpu_custom_call.1']
    #allocation7 [shape = 'u8[32768]{0}', space=vmem, size = 0x8000, scoped, tag = 'output window, operand 0, single buffered']
    %10 = vsyncpa [#allocation5], 0
    %11 = vsyncpa [#allocation6], 0
    // Predicated region
    $region2: #{tpu_custom_call.1} parent=1 // pred_check
      _
    $region3: #{tpu_custom_call.1} parent=1 // pred_check_branch
      %13 = sbr.rel (0) target = $region5
    $region4: #{tpu_custom_call.1} parent=1 // pred_region
      _
    $region5: #{tpu_custom_call.1} parent=1 // pred_fallthru
      _
    // Predicated region
    $region6: #{tpu_custom_call.1} parent=1 // pred_check
      _
    $region7: #{tpu_custom_call.1} parent=1 // pred_check_branch
      %15 = sbr.rel (0) target = $region9
    $region8: #{tpu_custom_call.1} parent=1 // pred_region
      _
    $region9: #{tpu_custom_call.1} parent=1 // pred_fallthru
      _
    // Predicated region
    $region10: #{tpu_custom_call.1} parent=1 // pred_check
      _
    $region11: #{tpu_custom_call.1} parent=1 // pred_check_branch
      %17 = sbr.rel (0) target = $region13
    $region12: #{tpu_custom_call.1} parent=1 // pred_region
      %s19 = ssub.s32 1024, 1024
      %20 = vsyncadd [#allocation5], %s19
      %s22 = sshll.u32 [#allocation4], 4
      %s23 = int_to_ptr.vmem [resolvable:$true] %s22
      %25 = dma.hbm_to_vmem [thread:$0]  %s2, 1024, %s23, [#allocation5]
    $region13: #{tpu_custom_call.1} parent=1 // pred_fallthru
      _
    // Predicated region
    $region14: #{tpu_custom_call.1} parent=1 // pred_check
      _
    $region15: #{tpu_custom_call.1} parent=1 // pred_check_branch
      %27 = sbr.rel (0) target = $region17
    $region16: #{tpu_custom_call.1} parent=1 // pred_region
      %28 = dma.done [#allocation5], 1024
    $region17: #{tpu_custom_call.1} parent=1 // pred_fallthru
      _
    %s29 = sld [smem:[#allocation2]]
    %s30 = sld [smem:[#allocation3]]
    %v31 = vld [vmem:[#allocation4] sm:$0xff]
    %v32 = vld [vmem:[#allocation4 + $0x8] sm:$0xff]
    %v33 = vld [vmem:[#allocation4 + $0x10] sm:$0xff]
    %v34 = vld [vmem:[#allocation4 + $0x18] sm:$0xff]
    %v35 = vld [vmem:[#allocation4 + $0x20] sm:$0xff]
    %v36 = vld [vmem:[#allocation4 + $0x28] sm:$0xff]
    %v37 = vld [vmem:[#allocation4 + $0x30] sm:$0xff]
    %v38 = vld [vmem:[#allocation4 + $0x38] sm:$0xff]
    %v39 = vstv %s29
    %v40 = vmul.f32 %v31, %v39
    %v41 = vmul.f32 %v32, %v39
    %v42 = vmul.f32 %v33, %v39
    %v43 = vmul.f32 %v34, %v39
    %v44 = vmul.f32 %v35, %v39
    %v45 = vmul.f32 %v36, %v39
    %v46 = vmul.f32 %v37, %v39
    %v47 = vmul.f32 %v38, %v39
    %v48 = vstv %s30
    %v49 = vadd.f32 %v40, %v48
    %v50 = vadd.f32 %v41, %v48
    %v51 = vadd.f32 %v42, %v48
    %v52 = vadd.f32 %v43, %v48
    %v53 = vadd.f32 %v44, %v48
    %v54 = vadd.f32 %v45, %v48
    %v55 = vadd.f32 %v46, %v48
    %v56 = vadd.f32 %v47, %v48
    %57 = vst [vmem:[#allocation7] sm:$0xff] %v49
    %58 = vst [vmem:[#allocation7 + $0x8] sm:$0xff] %v50
    %59 = vst [vmem:[#allocation7 + $0x10] sm:$0xff] %v51
    %60 = vst [vmem:[#allocation7 + $0x18] sm:$0xff] %v52
    %61 = vst [vmem:[#allocation7 + $0x20] sm:$0xff] %v53
    %62 = vst [vmem:[#allocation7 + $0x28] sm:$0xff] %v54
    %63 = vst [vmem:[#allocation7 + $0x30] sm:$0xff] %v55
    %64 = vst [vmem:[#allocation7 + $0x38] sm:$0xff] %v56
    // Predicated region
    $region18: #{tpu_custom_call.1} parent=1 // pred_check
      _
    $region19: #{tpu_custom_call.1} parent=1 // pred_check_branch
      %66 = sbr.rel (0) target = $region21
    $region20: #{tpu_custom_call.1} parent=1 // pred_region
      %s68 = ssub.s32 1024, 1024
      %69 = vsyncadd [#allocation6], %s68
      %s71 = sshll.u32 [#allocation7], 4
      %s72 = int_to_ptr.vmem [resolvable:$true] %s71
      %74 = dma.vmem_to_hbm [thread:$0]  %s72, 1024, %s3, [#allocation6]
    $region21: #{tpu_custom_call.1} parent=1 // pred_fallthru
      _
    // Predicated region
    $region22: #{tpu_custom_call.1} parent=1 // pred_check
      _
    $region23: #{tpu_custom_call.1} parent=1 // pred_check_branch
      %76 = sbr.rel (0) target = $region25
    $region24: #{tpu_custom_call.1} parent=1 // pred_region
      %77 = dma.done [#allocation6], 1024
    $region25: #{tpu_custom_call.1} parent=1 // pred_fallthru
      _
    %78 = vsyncpa [#allocation5], 1
    %79 = vsyncpa [#allocation6], 1

</llo_original>
